<compile_context>
chip_gen: v6e
topology: v6e:2x2x1
jax: 0.10.0
libtpu: 0.0.40
codegen_flags: <defaults>
</compile_context>

<pallas_src>
import jax
import jax.numpy as jnp
from jax.experimental import pallas as pl
from jax.experimental.pallas import tpu as pltpu


def _round_up(x, m):
    return ((x + m - 1) // m) * m


def pooler_kernel(x_ref, w_ref, b_ref, o_ref):
    # x_ref: (TILE_M, Hp)  w_ref: (Hp, Hp) resident  b_ref: (1, Hp)  o_ref: (TILE_M, Hp)
    y = jnp.dot(x_ref[...], w_ref[...], preferred_element_type=jnp.float32)
    y = y + b_ref[...].astype(jnp.float32)          # broadcast over rows
    o_ref[...] = jnp.tanh(y).astype(o_ref.dtype)    # EUP tanh in f32, then downcast


def _choose_tile_m(m, h_pad, itemsize):
    # Sublane multiple: 8 for f32, 16 for bf16 (packed sublanes).
    sub = 8 if itemsize >= 4 else 16
    target = 512 if itemsize >= 4 else 1024
    tm = min(target, _round_up(m, sub))
    # Keep double-buffered x+out tiles within ~8 MiB so the resident weight and
    # both pipeline buffers fit comfortably under the 32 MiB scoped default
    # (and v7x's 64 MiB physical VMEM).
    budget = 8 * 1024 * 1024
    while tm > sub and 4 * tm * h_pad * itemsize > budget:
        tm = max(sub, _round_up(tm // 2, sub))
    return tm


def pooler_forward(hidden_states, weight, bias):
    """tanh(hidden_states @ weight + bias).

    hidden_states: [..., H]; weight: [H_in, H_out] (transpose of the PyTorch
    nn.Linear weight of shape [out, in]); bias: [H_out].
    """
    orig_shape = hidden_states.shape
    H = orig_shape[-1]
    x2d = hidden_states.reshape(-1, H)
    M = x2d.shape[0]
    dtype = hidden_states.dtype
    itemsize = jnp.dtype(dtype).itemsize

    H_pad = _round_up(H, 128)                 # lane-dense last dim
    tm = _choose_tile_m(M, H_pad, itemsize)
    M_pad = _round_up(M, tm)                  # no partial M blocks

    if (M_pad, H_pad) != (M, H):
        x2d = jnp.pad(x2d, ((0, M_pad - M), (0, H_pad - H)))
    if H_pad != H:
        w = jnp.pad(weight, ((0, H_pad - H), (0, H_pad - H)))
        b2d = jnp.pad(bias, (0, H_pad - H)).reshape(1, H_pad)
    else:
        w = weight
        b2d = bias.reshape(1, H)

    grid_m = M_pad // tm

    cost = pl.CostEstimate(
        flops=2 * M_pad * H_pad * H_pad,
        transcendentals=M_pad * H_pad,
        bytes_accessed=itemsize * (2 * M_pad * H_pad + H_pad * H_pad + H_pad),
    )
    # Double-buffered x/out tiles + (double-buffer-allocated) weight + bias.
    vmem_need = itemsize * (4 * tm * H_pad + 2 * H_pad * H_pad + 2 * H_pad)
    vmem_limit = int(min(max(2 * vmem_need, 8 * 1024 * 1024), 64 * 1024 * 1024))

    out = pl.pallas_call(
        pooler_kernel,
        out_shape=jax.ShapeDtypeStruct((M_pad, H_pad), dtype),
        grid_spec=pltpu.PrefetchScalarGridSpec(
            num_scalar_prefetch=0,
            grid=(grid_m,),
            in_specs=[
                pl.BlockSpec((tm, H_pad), lambda i: (i, 0)),       # x tile (pipelined)
                pl.BlockSpec((H_pad, H_pad), lambda i: (0, 0)),    # weight resident
                pl.BlockSpec((1, H_pad), lambda i: (0, 0)),        # bias resident
            ],
            out_specs=pl.BlockSpec((tm, H_pad), lambda i: (i, 0)),
        ),
        compiler_params=pltpu.CompilerParams(
            dimension_semantics=("parallel",),   # independent M tiles -> megacore
            vmem_limit_bytes=vmem_limit,
        ),
        cost_estimate=cost,
    )(x2d, w, b2d)

    return out[:M, :H].reshape(orig_shape)


def clone_detection_poj_head(encoder_features, lengths, pooler_weight, pooler_bias):
    """Post-encoder forward of CloneDetectionPOJModel.

    encoder_features: [2*bs, S, H] — encoder outputs for cat([input, p_input]).
    lengths:          [2*bs] int   — cat([lengths, p_lengths]); model indexes at lengths-1.
    Returns:          [bs, 2, H]   — per-pair (anchor, positive) pooled vectors.
    """
    # TODO(synk): the PLBART encoder (self.encoder) is an external pretrained
    # module and is not translated; this head consumes its output features.
    two_bs, _, _ = encoder_features.shape
    bs = two_bs // 2
    idx = (lengths - 1).astype(jnp.int32)
    # Gather only the last-token vector per sequence in the wrapper, so the
    # pooler matmul runs over 2*bs rows instead of 2*bs*S (algorithmic win).
    vecs = encoder_features[jnp.arange(two_bs), idx, :]          # [2*bs, H]
    pooled = pooler_forward(vecs, pooler_weight, pooler_bias)    # [2*bs, H]
    return jnp.stack([pooled[:bs], pooled[bs:]], axis=1)         # [bs, 2, H]


if __name__ == "__main__":
    bs, S, H = 2, 8, 32
    key = jax.random.PRNGKey(0)
    k_f, k_l, k_w, k_b, k_h = jax.random.split(key, 5)

    # Fake encoder features for the concatenated (anchor, positive) batch.
    enc_feats = jax.random.normal(k_f, (2 * bs, S, H), dtype=jnp.float32)
    lengths = jax.random.randint(k_l, (2 * bs,), 1, S + 1, dtype=jnp.int32)

    # nn.Linear-style uniform init, weight stored as [H_in, H_out].
    bound = 1.0 / jnp.sqrt(jnp.float32(H))
    weight = jax.random.uniform(k_w, (H, H), jnp.float32, -bound, bound)
    bias = jax.random.uniform(k_b, (H,), jnp.float32, -bound, bound)

    out = clone_detection_poj_head(enc_feats, lengths, weight, bias)
    out = jax.block_until_ready(out)

    # Reference (plain JAX, same math as the PyTorch module).
    vecs_ref = enc_feats[jnp.arange(2 * bs), lengths - 1, :]
    pooled_ref = jnp.tanh(vecs_ref @ weight + bias)
    ref = jnp.stack([pooled_ref[:bs], pooled_ref[bs:]], axis=1)
    assert out.shape == (bs, 2, H)
    assert jnp.allclose(out, ref, atol=1e-5, rtol=1e-5)

    # Also exercise the generic pooler path on a [B, S, H] tensor.
    hs = jax.random.normal(k_h, (2, S, H), dtype=jnp.float32)
    p = jax.block_until_ready(pooler_forward(hs, weight, bias))
    assert jnp.allclose(p, jnp.tanh(hs @ weight + bias), atol=1e-5, rtol=1e-5)

    print("KERNEL_OK")
</pallas_src>

<mosaic_0001>
module attributes {stable_mosaic.version = 11 : i64} {
  func.func @pooler_kernel(%arg0: i32, %arg1: memref<8x128xf32, #tpu.memory_space<vmem>>, %arg2: memref<128x128xf32, #tpu.memory_space<vmem>>, %arg3: memref<1x128xf32, #tpu.memory_space<vmem>>, %arg4: memref<8x128xf32, #tpu.memory_space<vmem>>) attributes {dimension_semantics = [#tpu.dimension_semantics<parallel>], iteration_bounds = array<i64: 1>, scalar_prefetch = 0 : i64, scratch_operands = 0 : i64, tpu.core_type = #tpu.core_type<tc>, window_params = [{transform_indices = @transform_0, window_bounds = array<i64: 8, 128>}, {pipeline_mode = #tpu.pipeline_mode<synchronous>, transform_indices = @transform_1, window_bounds = array<i64: 128, 128>}, {pipeline_mode = #tpu.pipeline_mode<synchronous>, transform_indices = @transform_2, window_bounds = array<i64: 1, 128>}, {transform_indices = @transform_3, window_bounds = array<i64: 8, 128>}]} {
    %c0 = arith.constant 0 : index
    %c0_0 = arith.constant 0 : index
    %0 = vector.load %arg1[%c0, %c0_0] : memref<8x128xf32, #tpu.memory_space<vmem>>, vector<8x128xf32>
    %c0_1 = arith.constant 0 : index
    %c0_2 = arith.constant 0 : index
    %1 = vector.load %arg2[%c0_1, %c0_2] : memref<128x128xf32, #tpu.memory_space<vmem>>, vector<128x128xf32>
    %cst = arith.constant dense<0.000000e+00> : vector<8x128xf32>
    %2 = tpu.matmul %0, %1, %cst {dimension_numbers = #tpu.dot_dimension_numbers<[1], [0], [0], [1], [0, 0, 1, 1], [], []>} : vector<8x128xf32>, vector<128x128xf32>, vector<8x128xf32> -> vector<8x128xf32>
    %c0_3 = arith.constant 0 : index
    %c0_4 = arith.constant 0 : index
    %3 = vector.load %arg3[%c0_3, %c0_4] : memref<1x128xf32, #tpu.memory_space<vmem>>, vector<1x128xf32>
    %4 = vector.broadcast %3 : vector<1x128xf32> to vector<8x128xf32>
    %5 = arith.addf %2, %4 : vector<8x128xf32>
    %6 = math.tanh %5 : vector<8x128xf32>
    %c0_5 = arith.constant 0 : index
    %c0_6 = arith.constant 0 : index
    %7 = vector.load %arg4[%c0_5, %c0_6] : memref<8x128xf32, #tpu.memory_space<vmem>>, vector<8x128xf32>
    tpu.vector_store %arg4[%c0_5, %c0_6], %6 {strides = array<i32>} : memref<8x128xf32, #tpu.memory_space<vmem>>, vector<8x128xf32>,
    return
  }
  func.func @transform_0(%arg0: i32) -> (i32, i32) {
    %c0_i32 = arith.constant 0 : i32
    %c0_i32_0 = arith.constant 0 : i32
    return %arg0, %c0_i32 : i32, i32
  }
  func.func @transform_1(%arg0: i32) -> (i32, i32) {
    %c0_i32 = arith.constant 0 : i32
    %c0_i32_0 = arith.constant 0 : i32
    %c0_i32_1 = arith.constant 0 : i32
    return %c0_i32, %c0_i32_0 : i32, i32
  }
  func.func @transform_2(%arg0: i32) -> (i32, i32) {
    %c0_i32 = arith.constant 0 : i32
    %c0_i32_0 = arith.constant 0 : i32
    %c0_i32_1 = arith.constant 0 : i32
    return %c0_i32, %c0_i32_0 : i32, i32
  }
  func.func @transform_3(%arg0: i32) -> (i32, i32) {
    %c0_i32 = arith.constant 0 : i32
    %c0_i32_0 = arith.constant 0 : i32
    return %arg0, %c0_i32 : i32, i32
  }
}

</mosaic_0001>

<llo_original>
// kernel: tpu_custom_call.1
$region0: #{tpu_custom_call.1}
  #allocation0 [shape = 'u32[]', space=smem, size = 0x4, offset = 0x4, fixed_abs, tag = 'smem constant byte address 0x4 - core index']
  #allocation1 [shape = 'u32[144,128]{1,0:T(1,128)}', space=vmem, size = 0x12000, scoped, tag = 'internal scratch']
  %s0 = inlined_call_operand.hbm [shape: f32[8,128], index: 0, kind: input, shape index: {}]
  %s1 = inlined_call_operand.hbm [shape: f32[128,128], index: 1, kind: input, shape index: {}]
  %s2 = inlined_call_operand.vmem [shape: f32[1,128], index: 2, kind: input, shape index: {}]
  %s3 = inlined_call_operand.hbm [shape: f32[8,128], index: 3, kind: output, shape index: {}]
  %s4 = sld [smem:[#allocation0]]
  $region30: #{tpu_custom_call.1} parent=0
    _
  %s6 = ssub.s32 1, %s4
  %s7 = scalar_select 0, %s6, %s4
  $region1: #{tpu_custom_call.1} parent=0
    #allocation2 [shape = 'u8[4096]{0}', space=vmem, size = 0x1000, scoped, tag = 'input window, operand 0, single buffered']
    #allocation3 [shape = 's32[1]{0}', space=sflag, size = 0x4, scoped, tag = 'scoped memory for tpu_custom_call.1']
    #allocation4 [shape = 's32[1]{0}', space=sflag, size = 0x4, scoped, tag = 'scoped memory for tpu_custom_call.1']
    #allocation5 [shape = 'u8[65536]{0}', space=vmem, size = 0x10000, scoped, tag = 'input window, operand 1, single buffered']
    #allocation6 [shape = 's32[1]{0}', space=sflag, size = 0x4, scoped, tag = 'scoped memory for tpu_custom_call.1']
    #allocation7 [shape = 'u8[4096]{0}', space=vmem, size = 0x1000, scoped, tag = 'output window, operand 0, single buffered']
    %8 = vsyncpa [#allocation3], 0
    %9 = vsyncpa [#allocation6], 0
    %10 = vsyncpa [#allocation4], 0
    // Predicated region
    $region2: #{tpu_custom_call.1} parent=1 // pred_check
      _
    $region3: #{tpu_custom_call.1} parent=1 // pred_check_branch
      %12 = sbr.rel (0) target = $region5
    $region4: #{tpu_custom_call.1} parent=1 // pred_region
      %s14 = ssub.s32 128, 128
      %15 = vsyncadd [#allocation3], %s14
      %s17 = sshll.u32 [#allocation2], 4
      %s18 = int_to_ptr.vmem [resolvable:$true] %s17
      %20 = dma.hbm_to_vmem [thread:$0]  %s0, 128, %s18, [#allocation3]
    $region5: #{tpu_custom_call.1} parent=1 // pred_fallthru
      _
    // Predicated region
    $region6: #{tpu_custom_call.1} parent=1 // pred_check
      _
    $region7: #{tpu_custom_call.1} parent=1 // pred_check_branch
      %22 = sbr.rel (0) target = $region9
    $region8: #{tpu_custom_call.1} parent=1 // pred_region
      %s24 = ssub.s32 2048, 2048
      %25 = vsyncadd [#allocation6], %s24
      %s26 = sshll.u32 [#allocation5], 4
      %s27 = int_to_ptr.vmem [resolvable:$true] %s26
      %32 = dma.hbm_to_vmem [thread:$0]  %s1, 2048, %s27, [#allocation6], 128, 128, 8
    $region9: #{tpu_custom_call.1} parent=1 // pred_fallthru
      _
    // Predicated region
    $region10: #{tpu_custom_call.1} parent=1 // pred_check
      _
    $region11: #{tpu_custom_call.1} parent=1 // pred_check_branch
      %34 = sbr.rel (0) target = $region13
    $region12: #{tpu_custom_call.1} parent=1 // pred_region
      _
    $region13: #{tpu_custom_call.1} parent=1 // pred_fallthru
      _
    // Predicated region
    $region14: #{tpu_custom_call.1} parent=1 // pred_check
      _
    $region15: #{tpu_custom_call.1} parent=1 // pred_check_branch
      %36 = sbr.rel (0) target = $region17
    $region16: #{tpu_custom_call.1} parent=1 // pred_region
      %37 = dma.done [#allocation3], 128
    $region17: #{tpu_custom_call.1} parent=1 // pred_fallthru
      _
    // Predicated region
    $region18: #{tpu_custom_call.1} parent=1 // pred_check
      _
    $region19: #{tpu_custom_call.1} parent=1 // pred_check_branch
      %39 = sbr.rel (0) target = $region21
    $region20: #{tpu_custom_call.1} parent=1 // pred_region
      %40 = dma.done [#allocation6], 2048
    $region21: #{tpu_custom_call.1} parent=1 // pred_fallthru
      _
    %v41 = vld [vmem:[#allocation2] sm:$0xff]
    %v42 = vld [vmem:[#allocation5] sm:$0xff]
    %v43 = vld [vmem:[#allocation5 + $0x8] sm:$0xff]
    %v44 = vld [vmem:[#allocation5 + $0x10] sm:$0xff]
    %v45 = vld [vmem:[#allocation5 + $0x18] sm:$0xff]
    %v46 = vld [vmem:[#allocation5 + $0x20] sm:$0xff]
    %v47 = vld [vmem:[#allocation5 + $0x28] sm:$0xff]
    %v48 = vld [vmem:[#allocation5 + $0x30] sm:$0xff]
    %v49 = vld [vmem:[#allocation5 + $0x38] sm:$0xff]
    %v50 = vld [vmem:[#allocation5 + $0x40] sm:$0xff]
    %v51 = vld [vmem:[#allocation5 + $0x48] sm:$0xff]
    %v52 = vld [vmem:[#allocation5 + $0x50] sm:$0xff]
    %v53 = vld [vmem:[#allocation5 + $0x58] sm:$0xff]
    %v54 = vld [vmem:[#allocation5 + $0x60] sm:$0xff]
    %v55 = vld [vmem:[#allocation5 + $0x68] sm:$0xff]
    %v56 = vld [vmem:[#allocation5 + $0x70] sm:$0xff]
    %v57 = vld [vmem:[#allocation5 + $0x78] sm:$0xff]
    %v58 = vld [vmem:[%s2] sm:$0x1]
    %v60 = vlaneseq
    %v61 = vshrl.u32 %v60, 7
    %v62 = vsub.s32 0, %v61
    %v63 = vrot.slane %v58, %v62
    %65 = vmatprep.subr.mxu0 0.0
    %66 = vmatpush1.msra.mxu0 %v57
    %67 = vmatprep.subr.mxu0 0.0
    %68 = vmatpush1.msra.mxu0 %v56
    %69 = vmatprep.subr.mxu0 0.0
    %70 = vmatpush1.msra.mxu0 %v55
    %71 = vmatprep.subr.mxu0 0.0
    %72 = vmatpush1.msra.mxu0 %v54
    %73 = vmatprep.subr.mxu0 0.0
    %74 = vmatpush1.msra.mxu0 %v53
    %75 = vmatprep.subr.mxu0 0.0
    %76 = vmatpush1.msra.mxu0 %v52
    %77 = vmatprep.subr.mxu0 0.0
    %78 = vmatpush1.msra.mxu0 %v51
    %79 = vmatprep.subr.mxu0 0.0
    %80 = vmatpush1.msra.mxu0 %v50
    %81 = vmatprep.subr.mxu0 0.0
    %82 = vmatpush1.msra.mxu0 %v49
    %83 = vmatprep.subr.mxu0 0.0
    %84 = vmatpush1.msra.mxu0 %v48
    %85 = vmatprep.subr.mxu0 0.0
    %86 = vmatpush1.msra.mxu0 %v47
    %87 = vmatprep.subr.mxu0 0.0
    %88 = vmatpush1.msra.mxu0 %v46
    %89 = vmatprep.subr.mxu0 0.0
    %90 = vmatpush1.msra.mxu0 %v45
    %91 = vmatprep.subr.mxu0 0.0
    %92 = vmatpush1.msra.mxu0 %v44
    %93 = vmatprep.subr.mxu0 0.0
    %94 = vmatpush1.msra.mxu0 %v43
    %95 = vmatprep.subr.mxu0 0.0
    %96 = vmatpush1.msra.mxu0 %v42
    %97 = vmatprep.subr.mxu0 0.0
    %98 = vmatpush2.msra.mxu0 0.0
    %99 = vmatprep.subr.mxu0 0.0
    %100 = vmatpush2.msra.mxu0 0.0
    %101 = vmatprep.subr.mxu0 0.0
    %102 = vmatpush2.msra.mxu0 0.0
    %103 = vmatprep.subr.mxu0 0.0
    %104 = vmatpush2.msra.mxu0 0.0
    %105 = vmatprep.subr.mxu0 0.0
    %106 = vmatpush2.msra.mxu0 0.0
    %107 = vmatprep.subr.mxu0 0.0
    %108 = vmatpush2.msra.mxu0 0.0
    %109 = vmatprep.subr.mxu0 0.0
    %110 = vmatpush2.msra.mxu0 0.0
    %111 = vmatprep.subr.mxu0 0.0
    %112 = vmatpush2.msra.mxu0 0.0
    %113 = vmatprep.subr.mxu0 0.0
    %114 = vmatpush2.msra.mxu0 0.0
    %115 = vmatprep.subr.mxu0 0.0
    %116 = vmatpush2.msra.mxu0 0.0
    %117 = vmatprep.subr.mxu0 0.0
    %118 = vmatpush2.msra.mxu0 0.0
    %119 = vmatprep.subr.mxu0 0.0
    %120 = vmatpush2.msra.mxu0 0.0
    %121 = vmatprep.subr.mxu0 0.0
    %122 = vmatpush2.msra.mxu0 0.0
    %123 = vmatprep.subr.mxu0 0.0
    %124 = vmatpush2.msra.mxu0 0.0
    %125 = vmatprep.subr.mxu0 0.0
    %126 = vmatpush2.msra.mxu0 0.0
    %127 = vmatprep.subr.mxu0 0.0
    %128 = vmatpush2.msra.mxu0 0.0
    %129 = vmatprep.mubr.f32.mxu0 0.0
    %130 = vmatmul.mubr.f32.gmra.mxu0 %v41
    %v131 = vpop.f32.mrf.mxu0
    %v132 = vadd.f32 %v63, %v131
    %v133 = vpop.f32.mrf.mxu0
    %134 = vdwg.mxu0
    %v135 = vtanh.pop %v132
    %136 = vst [vmem:[#allocation7] sm:$0xff] %v135
    // Predicated region
    $region22: #{tpu_custom_call.1} parent=1 // pred_check
      _
    $region23: #{tpu_custom_call.1} parent=1 // pred_check_branch
      %138 = sbr.rel (0) target = $region25
    $region24: #{tpu_custom_call.1} parent=1 // pred_region
      %s140 = ssub.s32 128, 128
      %141 = vsyncadd [#allocation4], %s140
      %s143 = sshll.u32 [#allocation7], 4
      %s144 = int_to_ptr.vmem [resolvable:$true] %s143
      %146 = dma.vmem_to_hbm [thread:$0]  %s144, 128, %s3, [#allocation4]
    $region25: #{tpu_custom_call.1} parent=1 // pred_fallthru
      _
    // Predicated region
    $region26: #{tpu_custom_call.1} parent=1 // pred_check
      _
    $region27: #{tpu_custom_call.1} parent=1 // pred_check_branch
      %148 = sbr.rel (0) target = $region29
    $region28: #{tpu_custom_call.1} parent=1 // pred_region
      %149 = dma.done [#allocation4], 128
    $region29: #{tpu_custom_call.1} parent=1 // pred_fallthru
      _
    %150 = vsyncpa [#allocation3], 1
    %151 = vsyncpa [#allocation6], 1
    %152 = vsyncpa [#allocation4], 1

</llo_original>
